<compile_context>
chip_gen: v7x
topology: tpu7x:2x2x1
jax: 0.10.0
libtpu: 0.0.40
codegen_flags: <defaults>
</compile_context>

<pallas_src>
import jax
import jax.numpy as jnp
from jax import lax
from jax.experimental import pallas as pl
from jax.experimental.pallas import tpu as pltpu


def _make_mlp_kernel(apply_sigmoid_out: bool):
    def kernel(xt_ref, w1_ref, b1_ref, w2t_ref, b2_ref, o_ref):
        # xt_ref : (D_in, tile_n)   batch on lanes
        # w1_ref : (H, D_in)        torch nn.Linear layout, VMEM-resident
        # b1_ref : (H, 1)
        # w2t_ref: (H, D_out)
        # b2_ref : (D_out, 1)
        # o_ref  : (D_out, tile_n)  lane-dense output row
        h_dim, d_in = w1_ref.shape
        d_out = w2t_ref.shape[1]

        # ---- layer 1: h = w1 @ x^T + b1, shape (H, tile_n) ----------------
        if d_in <= 8:
            # D_in unrolled (H,1)x(1,tile_n) broadcast FMAs on the VPU:
            # exact f32 and avoids a drain-latency-bound K=D_in MXU matmul.
            acc = w1_ref[:, 0:1] * xt_ref[0:1, :]
            for f in range(1, d_in):
                acc = acc + w1_ref[:, f : f + 1] * xt_ref[f : f + 1, :]
        else:
            acc = lax.dot_general(
                w1_ref[...], xt_ref[...], (((1,), (0,)), ((), ())),
                preferred_element_type=jnp.float32)
        h = jax.nn.sigmoid(acc + b1_ref[...])        # f32 EUP, full lanes

        # ---- layer 2: o = w2 @ h + b2, shape (D_out, tile_n) --------------
        if d_out == 1:
            # (H, tile_n) * (H, 1) then a sublane reduction -> (1, tile_n):
            # lane-dense result straight from the VPU/XLU, exact f32.
            o = jnp.sum(h * w2t_ref[...], axis=0, keepdims=True)
        else:
            o = lax.dot_general(
                w2t_ref[...], h, (((0,), (0,)), ((), ())),
                preferred_element_type=jnp.float32)
        o = o + b2_ref[...]
        if apply_sigmoid_out:                         # fused predict_proba path
            o = jax.nn.sigmoid(o)
        o_ref[...] = o.astype(o_ref.dtype)

    return kernel


def _forward(x, w1, b1, w2, b2, *, tile_n, apply_sigmoid):
    """Logits or sigmoid(logits) for NetWithLogits, batch-on-lanes kernel."""
    N, D_in = x.shape
    H = w1.shape[0]
    D_out = w2.shape[0]

    # Present x as (D_in, N) so every kernel block is lane-dense (unmasked
    # full-lane DMAs, no lane padding in VMEM).  D_in is tiny, so this is one
    # cheap pass; see TODO(synk) at the top for the zero-copy alternative.
    xt = x.T                               # (D_in, N)
    w2t = w2.T                             # (H, D_out)  -- a few hundred bytes
    b1_col = b1.reshape(H, 1)
    b2_col = b2.reshape(D_out, 1)

    # Tile the batch along lanes.
    tile = min(tile_n, N)
    if N >= 256:
        # >= 2 grid steps so the "parallel" axis can split across both
        # TensorCores on v7x (harmless on single-TC v5e/v6e).
        tile = min(tile, (N // 2 // 128) * 128)
    if tile < N:
        tile = max(128, (tile // 128) * 128)   # streamed tiles: multiple of 128 lanes
        tile = min(tile, N)                    # tiny-N fallback: one full block
    grid = (pl.cdiv(N, tile),)

    out = pl.pallas_call(
        _make_mlp_kernel(apply_sigmoid),
        out_shape=jax.ShapeDtypeStruct((D_out, N), jnp.float32),
        grid=grid,
        in_specs=[
            pl.BlockSpec((D_in, tile), lambda i: (0, i)),   # streamed x tile
            pl.BlockSpec((H, D_in), lambda i: (0, 0)),      # resident weights
            pl.BlockSpec((H, 1), lambda i: (0, 0)),
            pl.BlockSpec((H, D_out), lambda i: (0, 0)),
            pl.BlockSpec((D_out, 1), lambda i: (0, 0)),
        ],
        out_specs=pl.BlockSpec((D_out, tile), lambda i: (0, i)),
        compiler_params=pltpu.CompilerParams(
            dimension_semantics=("parallel",)),             # megacore on v7x
    )(xt, w1, b1_col, w2t, b2_col)

    return out.T                            # (D_out, N) -> (N, D_out), ~free


def net_with_logits(x, w1, b1, w2, b2, *, tile_n=8192):
    """Forward pass of NetWithLogits (returns logits).

    x : (N, D_in) f32; w1: (H, D_in); b1: (H,); w2: (D_out, H); b2: (D_out,)
    (weights in PyTorch nn.Linear layout).
    """
    return _forward(x, w1, b1, w2, b2, tile_n=tile_n, apply_sigmoid=False)


def predict_proba(x, w1, b1, w2, b2, *, tile_n=8192):
    """sigmoid(logits), with the sigmoid fused into the kernel epilogue."""
    return _forward(x, w1, b1, w2, b2, tile_n=tile_n, apply_sigmoid=True)


def _init_linear(key, fan_out, fan_in):
    # Deterministic init mimicking torch.nn.Linear default:
    # U(-1/sqrt(fan_in), 1/sqrt(fan_in)) for both weight and bias.
    kw, kb = jax.random.split(key)
    bound = 1.0 / jnp.sqrt(jnp.float32(fan_in))
    w = jax.random.uniform(kw, (fan_out, fan_in), jnp.float32, -bound, bound)
    b = jax.random.uniform(kb, (fan_out,), jnp.float32, -bound, bound)
    return w, b


if __name__ == "__main__":
    # NetWithLogits(D_in=4, H=32, D_out=1); N=256 -> grid=(2,), exercising the
    # multi-tile pipelined path and the even grid split.
    N, D_in, H, D_out = 256, 4, 32, 1

    key = jax.random.PRNGKey(0)
    k_x, k_l1, k_l2 = jax.random.split(key, 3)

    x = jax.random.normal(k_x, (N, D_in), jnp.float32)
    w1, b1 = _init_linear(k_l1, H, D_in)
    w2, b2 = _init_linear(k_l2, D_out, H)

    logits = jax.block_until_ready(net_with_logits(x, w1, b1, w2, b2))

    # Exact-f32 elementwise reference (same math as the PyTorch forward).
    ref_pre = jnp.sum(x[:, None, :] * w1[None, :, :], axis=-1) + b1   # (N, H)
    ref_h = jax.nn.sigmoid(ref_pre)
    ref_logits = jnp.sum(ref_h[:, None, :] * w2[None, :, :], axis=-1) + b2  # (N, D_out)

    assert logits.shape == (N, D_out)
    max_err = float(jnp.max(jnp.abs(logits - ref_logits)))
    assert jnp.allclose(logits, ref_logits, atol=1e-4, rtol=1e-4), max_err

    probs = jax.block_until_ready(predict_proba(x, w1, b1, w2, b2))
    ref_probs = jax.nn.sigmoid(ref_logits)
    assert probs.shape == (N, D_out)
    assert jnp.allclose(probs, ref_probs, atol=1e-4, rtol=1e-4)

    print("KERNEL_OK")
</pallas_src>

<mosaic_0001>
module attributes {stable_mosaic.version = 11 : i64} {
  func.func @kernel(%arg0: i32, %arg1: memref<4x128xf32, #tpu.memory_space<vmem>>, %arg2: memref<32x4xf32, #tpu.memory_space<vmem>>, %arg3: memref<32x1xf32, #tpu.memory_space<vmem>>, %arg4: memref<32x1xf32, #tpu.memory_space<vmem>>, %arg5: memref<1x1xf32, #tpu.memory_space<vmem>>, %arg6: memref<1x128xf32, #tpu.memory_space<vmem>>) attributes {dimension_semantics = [#tpu.dimension_semantics<parallel>], iteration_bounds = array<i64: 2>, scalar_prefetch = 0 : i64, scratch_operands = 0 : i64, tpu.core_type = #tpu.core_type<tc>, window_params = [{transform_indices = @transform_0, window_bounds = array<i64: 4, 128>}, {pipeline_mode = #tpu.pipeline_mode<synchronous>, transform_indices = @transform_1, window_bounds = array<i64: 32, 4>}, {pipeline_mode = #tpu.pipeline_mode<synchronous>, transform_indices = @transform_2, window_bounds = array<i64: 32, 1>}, {pipeline_mode = #tpu.pipeline_mode<synchronous>, transform_indices = @transform_3, window_bounds = array<i64: 32, 1>}, {pipeline_mode = #tpu.pipeline_mode<synchronous>, transform_indices = @transform_4, window_bounds = array<i64: 1, 1>}, {transform_indices = @transform_5, window_bounds = array<i64: 1, 128>}]} {
    %c0 = arith.constant 0 : index
    %c0_0 = arith.constant 0 : index
    %0 = vector.load %arg2[%c0, %c0_0] : memref<32x4xf32, #tpu.memory_space<vmem>>, vector<32x1xf32>
    %c0_1 = arith.constant 0 : index
    %c0_2 = arith.constant 0 : index
    %1 = vector.load %arg1[%c0_1, %c0_2] : memref<4x128xf32, #tpu.memory_space<vmem>>, vector<1x128xf32>
    %2 = vector.broadcast %0 : vector<32x1xf32> to vector<32x128xf32>
    %3 = vector.broadcast %1 : vector<1x128xf32> to vector<32x128xf32>
    %4 = arith.mulf %2, %3 : vector<32x128xf32>
    %c0_3 = arith.constant 0 : index
    %c1 = arith.constant 1 : index
    %5 = vector.load %arg2[%c0_3, %c1] : memref<32x4xf32, #tpu.memory_space<vmem>>, vector<32x1xf32>
    %c1_4 = arith.constant 1 : index
    %c0_5 = arith.constant 0 : index
    %6 = vector.load %arg1[%c1_4, %c0_5] : memref<4x128xf32, #tpu.memory_space<vmem>>, vector<1x128xf32>
    %7 = vector.broadcast %5 : vector<32x1xf32> to vector<32x128xf32>
    %8 = vector.broadcast %6 : vector<1x128xf32> to vector<32x128xf32>
    %9 = arith.mulf %7, %8 : vector<32x128xf32>
    %10 = arith.addf %4, %9 : vector<32x128xf32>
    %c0_6 = arith.constant 0 : index
    %c2 = arith.constant 2 : index
    %11 = vector.load %arg2[%c0_6, %c2] : memref<32x4xf32, #tpu.memory_space<vmem>>, vector<32x1xf32>
    %c2_7 = arith.constant 2 : index
    %c0_8 = arith.constant 0 : index
    %12 = vector.load %arg1[%c2_7, %c0_8] : memref<4x128xf32, #tpu.memory_space<vmem>>, vector<1x128xf32>
    %13 = vector.broadcast %11 : vector<32x1xf32> to vector<32x128xf32>
    %14 = vector.broadcast %12 : vector<1x128xf32> to vector<32x128xf32>
    %15 = arith.mulf %13, %14 : vector<32x128xf32>
    %16 = arith.addf %10, %15 : vector<32x128xf32>
    %c0_9 = arith.constant 0 : index
    %c3 = arith.constant 3 : index
    %17 = vector.load %arg2[%c0_9, %c3] : memref<32x4xf32, #tpu.memory_space<vmem>>, vector<32x1xf32>
    %c3_10 = arith.constant 3 : index
    %c0_11 = arith.constant 0 : index
    %18 = vector.load %arg1[%c3_10, %c0_11] : memref<4x128xf32, #tpu.memory_space<vmem>>, vector<1x128xf32>
    %19 = vector.broadcast %17 : vector<32x1xf32> to vector<32x128xf32>
    %20 = vector.broadcast %18 : vector<1x128xf32> to vector<32x128xf32>
    %21 = arith.mulf %19, %20 : vector<32x128xf32>
    %22 = arith.addf %16, %21 : vector<32x128xf32>
    %c0_12 = arith.constant 0 : index
    %c0_13 = arith.constant 0 : index
    %23 = vector.load %arg3[%c0_12, %c0_13] : memref<32x1xf32, #tpu.memory_space<vmem>>, vector<32x1xf32>
    %24 = vector.broadcast %23 : vector<32x1xf32> to vector<32x128xf32>
    %25 = arith.addf %22, %24 : vector<32x128xf32>
    %26 = arith.negf %25 : vector<32x128xf32>
    %27 = math.exp %26 : vector<32x128xf32>
    %cst = arith.constant 1.000000e+00 : f32
    %28 = vector.broadcast %cst : f32 to vector<32x128xf32>
    %29 = arith.addf %28, %27 : vector<32x128xf32>
    %30 = arith.divf %28, %29 : vector<32x128xf32>
    %c0_14 = arith.constant 0 : index
    %c0_15 = arith.constant 0 : index
    %31 = vector.load %arg4[%c0_14, %c0_15] : memref<32x1xf32, #tpu.memory_space<vmem>>, vector<32x1xf32>
    %32 = vector.broadcast %31 : vector<32x1xf32> to vector<32x128xf32>
    %33 = arith.mulf %30, %32 : vector<32x128xf32>
    %cst_16 = arith.constant dense<0.000000e+00> : vector<128xf32>
    %34 = vector.multi_reduction <add>, %33, %cst_16 [0] : vector<32x128xf32> to vector<128xf32>
    %35 = vector.shape_cast %34 : vector<128xf32> to vector<1x128xf32>
    %c0_17 = arith.constant 0 : index
    %c0_18 = arith.constant 0 : index
    %36 = vector.load %arg5[%c0_17, %c0_18] : memref<1x1xf32, #tpu.memory_space<vmem>>, vector<1x1xf32>
    %37 = vector.broadcast %36 : vector<1x1xf32> to vector<1x128xf32>
    %38 = arith.addf %35, %37 : vector<1x128xf32>
    %c0_19 = arith.constant 0 : index
    %c0_20 = arith.constant 0 : index
    %39 = vector.load %arg6[%c0_19, %c0_20] : memref<1x128xf32, #tpu.memory_space<vmem>>, vector<1x128xf32>
    tpu.vector_store %arg6[%c0_19, %c0_20], %38 {strides = array<i32>} : memref<1x128xf32, #tpu.memory_space<vmem>>, vector<1x128xf32>,
    return
  }
  func.func @transform_0(%arg0: i32) -> (i32, i32) {
    %c0_i32 = arith.constant 0 : i32
    %c0_i32_0 = arith.constant 0 : i32
    return %c0_i32, %arg0 : i32, i32
  }
  func.func @transform_1(%arg0: i32) -> (i32, i32) {
    %c0_i32 = arith.constant 0 : i32
    %c0_i32_0 = arith.constant 0 : i32
    %c0_i32_1 = arith.constant 0 : i32
    return %c0_i32, %c0_i32_0 : i32, i32
  }
  func.func @transform_2(%arg0: i32) -> (i32, i32) {
    %c0_i32 = arith.constant 0 : i32
    %c0_i32_0 = arith.constant 0 : i32
    %c0_i32_1 = arith.constant 0 : i32
    return %c0_i32, %c0_i32_0 : i32, i32
  }
  func.func @transform_3(%arg0: i32) -> (i32, i32) {
    %c0_i32 = arith.constant 0 : i32
    %c0_i32_0 = arith.constant 0 : i32
    %c0_i32_1 = arith.constant 0 : i32
    return %c0_i32, %c0_i32_0 : i32, i32
  }
  func.func @transform_4(%arg0: i32) -> (i32, i32) {
    %c0_i32 = arith.constant 0 : i32
    %c0_i32_0 = arith.constant 0 : i32
    %c0_i32_1 = arith.constant 0 : i32
    return %c0_i32, %c0_i32_0 : i32, i32
  }
  func.func @transform_5(%arg0: i32) -> (i32, i32) {
    %c0_i32 = arith.constant 0 : i32
    %c0_i32_0 = arith.constant 0 : i32
    return %c0_i32, %arg0 : i32, i32
  }
}

</mosaic_0001>

<llo_original>
// kernel: tpu_custom_call.1
$region0: #{tpu_custom_call.1}
  #allocation0 [shape = 'u32[]', space=smem, size = 0x4, offset = 0x4, fixed_abs, tag = 'smem constant byte address 0x4 - core index']
  #allocation1 [shape = 'u32[144,128]{1,0:T(1,128)}', space=vmem, size = 0x12000, scoped, tag = 'internal scratch']
  #allocation2 [shape = 'f32[1,1]{1,0:T(1,128)S(1)}', space=vmem, size = 0x200, scoped, tag = 'scoped memory for tpu_custom_call.1']
  %s0 = inlined_call_operand.vmem [shape: f32[4,256], index: 0, kind: input, shape index: {}]
  %s1 = inlined_call_operand.vmem [shape: f32[32,4], index: 1, kind: input, shape index: {}]
  %s2 = inlined_call_operand.vmem [shape: f32[32,1], index: 2, kind: input, shape index: {}]
  %s3 = inlined_call_operand.vmem [shape: f32[32,1], index: 3, kind: input, shape index: {}]
  %s4 = inlined_call_operand.<no memory space> [shape: f32[1,1], index: 4, kind: input, shape index: {}]
  %s5 = inlined_call_operand.hbm [shape: f32[1,256], index: 5, kind: output, shape index: {}]
  %s6 = sld [smem:[#allocation0]]
  $region53: #{tpu_custom_call.1} parent=0
    _
  %s8 = ssub.s32 1, %s6
  %s9 = scalar_select 0, %s8, %s6
  %v10 = vstv %s4
  %11 = vst [vmem:[#allocation2] sm:$0x1] %v10
  $region1: #{tpu_custom_call.1} parent=0
    #allocation3 [shape = 'u8[1024]{0}', space=vmem, size = 0x400, scoped, tag = 'output window, operand 0']
    #allocation4 [shape = 's32[2]{0}', space=sflag, size = 0x8, scoped, tag = 'scoped memory for tpu_custom_call.1']
    %12 = vsyncpa [#allocation4], 0
    %s13 = scalar_lea.sflag [#allocation4], 1
    %14 = vsyncpa %s13, 0
    loop: start=0, step=1, limit=4
    $region2: #{tpu_custom_call.1} parent=1 // loop_pre_header
      _
    $region3: #{tpu_custom_call.1} parent=1 // loop_header
      %s16 = sphi 0, %s20
      %p17 = scmp.ge.s32.totalorder %s16, 4
      %s26 = sphi 0, %s28
      %s29 = sphi 0, %s26
      %s30 = sphi 0, %s29
      %s46 = sphi 0, %s30
      %s50 = sphi 0, %s50
      %s52 = sphi 0, %s50
      %s53 = sphi 0, %s52
      %s67 = sphi 0, %s53
      %s71 = sphi 0, %s71
      %s73 = sphi 0, %s71
      %s74 = sphi 0, %s73
      %s88 = sphi 0, %s74
      %s92 = sphi 0, %s92
      %s94 = sphi 0, %s92
      %s95 = sphi 0, %s94
      %s109 = sphi 0, %s95
      %s113 = sphi 0, %s113
      %s115 = sphi 0, %s113
      %s116 = sphi 0, %s115
      %s130 = sphi 0, %s116
      %s136 = sphi 0, %s138
      %s139 = sphi 0, %s136
      %s140 = sphi 0, %s139
      %s156 = sphi 0, %s140
    $region4: #{tpu_custom_call.1} parent=1 // loop_header_branch
      %19 = sbr.rel (%p17) target = $region8
    $region5: #{tpu_custom_call.1} parent=1 // loop_body
      %s21 = ssub.s32 %s16, 1
      %s22 = ssub.s32 %s16, 2
      %s23 = sadd.s32 %s16, 1
      %s24 = ssub.s32 %s16, %s23
      %p25 = scmp.eq.s32.totalorder %s24, 0
      %s27 = sadd.s32 %s26, 1
      %s28 = scalar_select %p25, %s26, %s27
      %p31 = pneg %p25
      %p32 = scmp.eq.s32.totalorder %s16, 1
      %p33 = por %p31, %p32
      %p34 = scmp.ne.s32.totalorder %s26, %s29
      %p35 = scmp.eq.s32.totalorder %s16, 0
      %p36 = por %p34, %p35
      %p37 = scmp.ne.s32.totalorder %s26, %s29
      %p38 = scmp.eq.s32.totalorder %s21, 1
      %p39 = por %p37, %p38
      %p40 = scmp.ne.s32.totalorder %s29, %s30
      %p41 = scmp.eq.s32.totalorder %s21, 0
      %p42 = por %p40, %p41
      %p43 = scmp.ne.s32.totalorder %s29, %s30
      %p44 = scmp.eq.s32.totalorder %s22, 1
      %p45 = por %p43, %p44
      %p47 = scmp.ne.s32.totalorder %s30, %s46
      %p48 = scmp.eq.s32.totalorder %s22, 0
      %p49 = por %p47, %p48
      %s51 = sadd.s32 %s50, 1
      %p54 = scmp.eq.s32.totalorder %s16, 1
      %p55 = scmp.ne.s32.totalorder %s50, %s52
      %p56 = scmp.eq.s32.totalorder %s16, 0
      %p57 = por %p55, %p56
      %p58 = scmp.ne.s32.totalorder %s50, %s52
      %p59 = scmp.eq.s32.totalorder %s21, 1
      %p60 = por %p58, %p59
      %p61 = scmp.ne.s32.totalorder %s52, %s53
      %p62 = scmp.eq.s32.totalorder %s21, 0
      %p63 = por %p61, %p62
      %p64 = scmp.ne.s32.totalorder %s52, %s53
      %p65 = scmp.eq.s32.totalorder %s22, 1
      %p66 = por %p64, %p65
      %p68 = scmp.ne.s32.totalorder %s53, %s67
      %p69 = scmp.eq.s32.totalorder %s22, 0
      %p70 = por %p68, %p69
      %s72 = sadd.s32 %s71, 1
      %p75 = scmp.eq.s32.totalorder %s16, 1
      %p76 = scmp.ne.s32.totalorder %s71, %s73
      %p77 = scmp.eq.s32.totalorder %s16, 0
      %p78 = por %p76, %p77
      %p79 = scmp.ne.s32.totalorder %s71, %s73
      %p80 = scmp.eq.s32.totalorder %s21, 1
      %p81 = por %p79, %p80
      %p82 = scmp.ne.s32.totalorder %s73, %s74
      %p83 = scmp.eq.s32.totalorder %s21, 0
      %p84 = por %p82, %p83
      %p85 = scmp.ne.s32.totalorder %s73, %s74
      %p86 = scmp.eq.s32.totalorder %s22, 1
      %p87 = por %p85, %p86
      %p89 = scmp.ne.s32.totalorder %s74, %s88
      %p90 = scmp.eq.s32.totalorder %s22, 0
      %p91 = por %p89, %p90
      %s93 = sadd.s32 %s92, 1
      %p96 = scmp.eq.s32.totalorder %s16, 1
      %p97 = scmp.ne.s32.totalorder %s92, %s94
      %p98 = scmp.eq.s32.totalorder %s16, 0
      %p99 = por %p97, %p98
      %p100 = scmp.ne.s32.totalorder %s92, %s94
      %p101 = scmp.eq.s32.totalorder %s21, 1
      %p102 = por %p100, %p101
      %p103 = scmp.ne.s32.totalorder %s94, %s95
      %p104 = scmp.eq.s32.totalorder %s21, 0
      %p105 = por %p103, %p104
      %p106 = scmp.ne.s32.totalorder %s94, %s95
      %p107 = scmp.eq.s32.totalorder %s22, 1
      %p108 = por %p106, %p107
      %p110 = scmp.ne.s32.totalorder %s95, %s109
      %p111 = scmp.eq.s32.totalorder %s22, 0
      %p112 = por %p110, %p111
      %s114 = sadd.s32 %s113, 1
      %p117 = scmp.eq.s32.totalorder %s16, 1
      %p118 = scmp.ne.s32.totalorder %s113, %s115
      %p119 = scmp.eq.s32.totalorder %s16, 0
      %p120 = por %p118, %p119
      %p121 = scmp.ne.s32.totalorder %s113, %s115
      %p122 = scmp.eq.s32.totalorder %s21, 1
      %p123 = por %p121, %p122
      %p124 = scmp.ne.s32.totalorder %s115, %s116
      %p125 = scmp.eq.s32.totalorder %s21, 0
      %p126 = por %p124, %p125
      %p127 = scmp.ne.s32.totalorder %s115, %s116
      %p128 = scmp.eq.s32.totalorder %s22, 1
      %p129 = por %p127, %p128
      %p131 = scmp.ne.s32.totalorder %s116, %s130
      %p132 = scmp.eq.s32.totalorder %s22, 0
      %p133 = por %p131, %p132
      %s134 = ssub.s32 %s16, %s23
      %p135 = scmp.eq.s32.totalorder %s134, 0
      %s137 = sadd.s32 %s136, 1
      %s138 = scalar_select %p135, %s136, %s137
      %p141 = pneg %p135
      %p142 = scmp.eq.s32.totalorder %s16, 1
      %p143 = por %p141, %p142
      %p144 = scmp.ne.s32.totalorder %s136, %s139
      %p145 = scmp.eq.s32.totalorder %s16, 0
      %p146 = por %p144, %p145
      %p147 = scmp.ne.s32.totalorder %s136, %s139
      %p148 = scmp.eq.s32.totalorder %s21, 1
      %p149 = por %p147, %p148
      %p150 = scmp.ne.s32.totalorder %s139, %s140
      %p151 = scmp.eq.s32.totalorder %s21, 0
      %p152 = por %p150, %p151
      %p153 = scmp.ne.s32.totalorder %s139, %s140
      %p154 = scmp.eq.s32.totalorder %s22, 1
      %p155 = por %p153, %p154
      %p157 = scmp.ne.s32.totalorder %s140, %s156
      %p158 = scmp.eq.s32.totalorder %s22, 0
      %p159 = por %p157, %p158
      %p160 = scmp.le.s32.totalorder 1, %s16
      %p161 = scmp.lt.s32.totalorder %s16, 3
      %p162 = pnand %p160, %p161
      %p163 = pneg %p162
      // Predicated region
      $region9: #{tpu_custom_call.1} parent=5 // pred_check
        _
      $region10: #{tpu_custom_call.1} parent=5 // pred_check_branch
        %165 = sbr.rel (%p162) target = $region12
      $region11: #{tpu_custom_call.1} parent=5 // pred_region
        %s166 = ssub.s32 %s16, 1
        // Predicated region
        $region13: #{tpu_custom_call.1} parent=11 // pred_check
          %p167 = pneg %p63
        $region14: #{tpu_custom_call.1} parent=11 // pred_check_branch
          %169 = sbr.rel (%p167) target = $region16
        $region15: #{tpu_custom_call.1} parent=11 // pred_region
          _
        $region16: #{tpu_custom_call.1} parent=11 // pred_fallthru
          _
        // Predicated region
        $region17: #{tpu_custom_call.1} parent=11 // pred_check
          %p170 = pneg %p84
        $region18: #{tpu_custom_call.1} parent=11 // pred_check_branch
          %172 = sbr.rel (%p170) target = $region20
        $region19: #{tpu_custom_call.1} parent=11 // pred_region
          _
        $region20: #{tpu_custom_call.1} parent=11 // pred_fallthru
          _
        // Predicated region
        $region21: #{tpu_custom_call.1} parent=11 // pred_check
          %p173 = pneg %p105
        $region22: #{tpu_custom_call.1} parent=11 // pred_check_branch
          %175 = sbr.rel (%p173) target = $region24
        $region23: #{tpu_custom_call.1} parent=11 // pred_region
          _
        $region24: #{tpu_custom_call.1} parent=11 // pred_fallthru
          _
        // Predicated region
        $region25: #{tpu_custom_call.1} parent=11 // pred_check
          %p176 = pneg %p126
        $region26: #{tpu_custom_call.1} parent=11 // pred_check_branch
          %178 = sbr.rel (%p176) target = $region28
        $region27: #{tpu_custom_call.1} parent=11 // pred_region
          _
        $region28: #{tpu_custom_call.1} parent=11 // pred_fallthru
          _
      $region12: #{tpu_custom_call.1} parent=5 // pred_fallthru
        _
      %p179 = scmp.lt.s32.totalorder %s16, 2
      // Predicated region
      $region29: #{tpu_custom_call.1} parent=5 // pred_check
        %p180 = pneg %p179
      $region30: #{tpu_custom_call.1} parent=5 // pred_check_branch
        %182 = sbr.rel (%p180) target = $region32
      $region31: #{tpu_custom_call.1} parent=5 // pred_region
        // Predicated region
        $region33: #{tpu_custom_call.1} parent=31 // pred_check
          %p183 = pneg %p36
        $region34: #{tpu_custom_call.1} parent=31 // pred_check_branch
          %185 = sbr.rel (%p183) target = $region36
        $region35: #{tpu_custom_call.1} parent=31 // pred_region
          %p186 = scmp.lt.s32.totalorder %s16, 1
          %s187 = scalar_select %p186, %s16, 1
          %s188 = smul.addr %s187, 4
          %s189 = scalar_lea.vmem %s0, %s188
        $region36: #{tpu_custom_call.1} parent=31 // pred_fallthru
          _
      $region32: #{tpu_custom_call.1} parent=5 // pred_fallthru
        _
      %p190 = scmp.le.s32.totalorder 1, %s16
      %p191 = scmp.lt.s32.totalorder %s16, 3
      %p192 = pnand %p190, %p191
      %p193 = pneg %p192
      // Predicated region
      $region37: #{tpu_custom_call.1} parent=5 // pred_check
        _
      $region38: #{tpu_custom_call.1} parent=5 // pred_check_branch
        %195 = sbr.rel (%p192) target = $region40
      $region39: #{tpu_custom_call.1} parent=5 // pred_region
        %s196 = ssub.s32 %s16, 1
        %p197 = scmp.lt.s32.totalorder %s21, 1
        %s198 = scalar_select %p197, %s21, 1
        %s199 = smul.addr %s198, 4
        %s200 = scalar_lea.vmem %s0, %s199
        %p201 = pneg %p42
        %p202 = pneg %p39
        %p203 = pneg %p63
        %p204 = pneg %p60
        %p205 = pneg %p84
        %p206 = pneg %p81
        %p207 = pneg %p105
        %p208 = pneg %p102
        %p209 = pneg %p126
        %p210 = pneg %p123
        %p211 = pneg %p152
        %p212 = pneg %p149
        %s213 = sand.u32 %s139, 1
        %s214 = scalar_lea.sflag [#allocation4], %s213
        %s215 = sand.u32 %s139, 1
        %s216 = scalar_lea.vmem [#allocation3], %s215
        %p217 = scmp.lt.s32.totalorder %s21, 1
        %s218 = scalar_select %p217, %s21, 1
        %s219 = smul.addr %s218, 4
        %s220 = scalar_lea.vmem %s0, %s219
        %v221 = vld [vmem:[%s1] sm:$0xff]
        %v222 = vld [vmem:[%s1 + $0x8] sm:$0xff]
        %v223 = vld [vmem:[%s1 + $0x10] sm:$0xff]
        %v224 = vld [vmem:[%s1 + $0x18] sm:$0xff]
        %v225 = vld [vmem:[%s220] sm:$0x1]
        %227 = vset.pattern.permute.xlu0 0
        %228 = vperm.xlu0 %227, %v221
        %v229 = vpop.permute.xlu0 %228
        %232 = vset.pattern.permute.xlu0 0
        %233 = vperm.xlu0 %232, %v222
        %v234 = vpop.permute.xlu0 %233
        %237 = vset.pattern.permute.xlu0 0
        %238 = vperm.xlu0 %237, %v223
        %v239 = vpop.permute.xlu0 %238
        %242 = vset.pattern.permute.xlu0 0
        %243 = vperm.xlu0 %242, %v224
        %v244 = vpop.permute.xlu0 %243
        %v246 = vlaneseq
        %v247 = vshrl.u32 %v246, 7
        %v248 = vsub.s32 0, %v247
        %v249 = vrot.slane %v225, %v248
        %v250 = vmul.f32 %v229, %v249
        %v251 = vmul.f32 %v234, %v249
        %v252 = vmul.f32 %v239, %v249
        %v253 = vmul.f32 %v244, %v249
        %v254 = vld [vmem:[%s220 + $0x1] sm:$0x1]
        %255 = vset.pattern.permute.xlu0 1
        %256 = vperm.xlu0 %255, %v221
        %v257 = vpop.permute.xlu0 %256
        %259 = vset.pattern.permute.xlu0 1
        %260 = vperm.xlu0 %259, %v222
        %v261 = vpop.permute.xlu0 %260
        %263 = vset.pattern.permute.xlu0 1
        %264 = vperm.xlu0 %263, %v223
        %v265 = vpop.permute.xlu0 %264
        %267 = vset.pattern.permute.xlu0 1
        %268 = vperm.xlu0 %267, %v224
        %v269 = vpop.permute.xlu0 %268
        %v271 = vlaneseq
        %v272 = vshrl.u32 %v271, 7
        %v273 = vsub.s32 0, %v272
        %v274 = vrot.slane %v254, %v273
        %v275 = vmul.f32 %v257, %v274
        %v276 = vmul.f32 %v261, %v274
        %v277 = vmul.f32 %v265, %v274
        %v278 = vmul.f32 %v269, %v274
        %v279 = vadd.f32 %v250, %v275
        %v280 = vadd.f32 %v251, %v276
        %v281 = vadd.f32 %v252, %v277
        %v282 = vadd.f32 %v253, %v278
        %v283 = vld [vmem:[%s220 + $0x2] sm:$0x1]
        %284 = vset.pattern.permute.xlu0 2
        %285 = vperm.xlu0 %284, %v221
        %v286 = vpop.permute.xlu0 %285
        %288 = vset.pattern.permute.xlu0 2
        %289 = vperm.xlu0 %288, %v222
        %v290 = vpop.permute.xlu0 %289
        %292 = vset.pattern.permute.xlu0 2
        %293 = vperm.xlu0 %292, %v223
        %v294 = vpop.permute.xlu0 %293
        %296 = vset.pattern.permute.xlu0 2
        %297 = vperm.xlu0 %296, %v224
        %v298 = vpop.permute.xlu0 %297
        %v300 = vlaneseq
        %v301 = vshrl.u32 %v300, 7
        %v302 = vsub.s32 0, %v301
        %v303 = vrot.slane %v283, %v302
        %v304 = vmul.f32 %v286, %v303
        %v305 = vmul.f32 %v290, %v303
        %v306 = vmul.f32 %v294, %v303
        %v307 = vmul.f32 %v298, %v303
        %v308 = vadd.f32 %v279, %v304
        %v309 = vadd.f32 %v280, %v305
        %v310 = vadd.f32 %v281, %v306
        %v311 = vadd.f32 %v282, %v307
        %v312 = vld [vmem:[%s220 + $0x3] sm:$0x1]
        %313 = vset.pattern.permute.xlu0 3
        %314 = vperm.xlu0 %313, %v221
        %v315 = vpop.permute.xlu0 %314
        %317 = vset.pattern.permute.xlu0 3
        %318 = vperm.xlu0 %317, %v222
        %v319 = vpop.permute.xlu0 %318
        %321 = vset.pattern.permute.xlu0 3
        %322 = vperm.xlu0 %321, %v223
        %v323 = vpop.permute.xlu0 %322
        %325 = vset.pattern.permute.xlu0 3
        %326 = vperm.xlu0 %325, %v224
        %v327 = vpop.permute.xlu0 %326
        %v329 = vlaneseq
        %v330 = vshrl.u32 %v329, 7
        %v331 = vsub.s32 0, %v330
        %v332 = vrot.slane %v312, %v331
        %v333 = vmul.f32 %v315, %v332
        %v334 = vmul.f32 %v319, %v332
        %v335 = vmul.f32 %v323, %v332
        %v336 = vmul.f32 %v327, %v332
        %v337 = vadd.f32 %v308, %v333
        %v338 = vadd.f32 %v309, %v334
        %v339 = vadd.f32 %v310, %v335
        %v340 = vadd.f32 %v311, %v336
        %v341 = vld [vmem:[%s2] sm:$0xff]
        %v342 = vld [vmem:[%s2 + $0x8] sm:$0xff]
        %v343 = vld [vmem:[%s2 + $0x10] sm:$0xff]
        %v344 = vld [vmem:[%s2 + $0x18] sm:$0xff]
        %346 = vset.pattern.permute.xlu0 0
        %347 = vperm.xlu0 %346, %v341
        %v348 = vpop.permute.xlu0 %347
        %351 = vset.pattern.permute.xlu0 0
        %352 = vperm.xlu0 %351, %v342
        %v353 = vpop.permute.xlu0 %352
        %356 = vset.pattern.permute.xlu0 0
        %357 = vperm.xlu0 %356, %v343
        %v358 = vpop.permute.xlu0 %357
        %361 = vset.pattern.permute.xlu0 0
        %362 = vperm.xlu0 %361, %v344
        %v363 = vpop.permute.xlu0 %362
        %v365 = vadd.f32 %v337, %v348
        %v366 = vadd.f32 %v338, %v353
        %v367 = vadd.f32 %v339, %v358
        %v368 = vadd.f32 %v340, %v363
        %v369 = vxor.u32 %v365, 2147483648
        %v370 = vxor.u32 %v366, 2147483648
        %v371 = vxor.u32 %v367, 2147483648
        %v372 = vxor.u32 %v368, 2147483648
        %v373 = vmul.f32 %v369, 1.442695
        %v374 = vpow.pop %v373
        %v375 = vmul.f32 %v370, 1.442695
        %v376 = vpow.pop %v375
        %v377 = vmul.f32 %v371, 1.442695
        %v378 = vpow.pop %v377
        %v379 = vmul.f32 %v372, 1.442695
        %v380 = vpow.pop %v379
        %v381 = vadd.f32 %v374, 1.0
        %v382 = vadd.f32 %v376, 1.0
        %v383 = vadd.f32 %v378, 1.0
        %v384 = vadd.f32 %v380, 1.0
        %v385 = vrcp.pop %v381
        %v386 = vmul.f32 1.0, %v385
        %v387 = vrcp.pop %v382
        %v388 = vmul.f32 1.0, %v387
        %v389 = vrcp.pop %v383
        %v390 = vmul.f32 1.0, %v389
        %v391 = vrcp.pop %v384
        %v392 = vmul.f32 1.0, %v391
        %v393 = vld [vmem:[%s3] sm:$0xff]
        %v394 = vld [vmem:[%s3 + $0x8] sm:$0xff]
        %v395 = vld [vmem:[%s3 + $0x10] sm:$0xff]
        %v396 = vld [vmem:[%s3 + $0x18] sm:$0xff]
        %398 = vset.pattern.permute.xlu0 0
        %399 = vperm.xlu0 %398, %v393
        %v400 = vpop.permute.xlu0 %399
        %403 = vset.pattern.permute.xlu0 0
        %404 = vperm.xlu0 %403, %v394
        %v405 = vpop.permute.xlu0 %404
        %408 = vset.pattern.permute.xlu0 0
        %409 = vperm.xlu0 %408, %v395
        %v410 = vpop.permute.xlu0 %409
        %413 = vset.pattern.permute.xlu0 0
        %414 = vperm.xlu0 %413, %v396
        %v415 = vpop.permute.xlu0 %414
        %v417 = vmul.f32 %v386, %v400
        %v418 = vmul.f32 %v388, %v405
        %v419 = vmul.f32 %v390, %v410
        %v420 = vmul.f32 %v392, %v415
        %v421 = vadd.f32 %v417, %v418
        %v422 = vadd.f32 %v421, %v419
        %v423 = vadd.f32 %v422, %v420
        %v424 = vrot.slane %v423, 4
        %v425 = vadd.f32 %v423, %v424
        %v426 = vrot.slane %v425, 2
        %v427 = vadd.f32 %v425, %v426
        %v428 = vrot.slane %v427, 1
        %v429 = vadd.f32 %v427, %v428
        %v430 = vld [vmem:[#allocation2] sm:$0x1]
        %432 = vset.pattern.permute.xlu0 0
        %433 = vperm.xlu0 %432, %v430
        %v434 = vpop.permute.xlu0 %433
        %v436 = vlaneseq
        %v437 = vshrl.u32 %v436, 7
        %v438 = vsub.s32 0, %v437
        %v439 = vrot.slane %v434, %v438
        %v440 = vadd.f32 %v429, %v439
        %441 = vst [vmem:[%s216] sm:$0x1] %v440
        %s442 = sand.u32 %s139, 1
        %s443 = scalar_lea.sflag [#allocation4], %s442
        %s444 = sand.u32 %s139, 1
        %s445 = scalar_lea.vmem [#allocation3], %s444
        // Predicated region
        $region41: #{tpu_custom_call.1} parent=39 // pred_check
          %p446 = pneg %p149
        $region42: #{tpu_custom_call.1} parent=39 // pred_check_branch
          %448 = sbr.rel (%p446) target = $region44
        $region43: #{tpu_custom_call.1} parent=39 // pred_region
          %s450 = ssub.s32 16, 16
          %451 = vsyncadd %s443, %s450
          %s452 = smul.addr %s21, 16
          %s453 = scalar_lea.hbm %s5, %s452
          %s455 = sshll.u32 %s445, 4
          %s456 = int_to_ptr.vmem [resolvable:$true] %s455
          %458 = dma.vmem_to_hbm [thread:$0]  %s456, 16, %s453, %s443
        $region44: #{tpu_custom_call.1} parent=39 // pred_fallthru
          _
      $region40: #{tpu_custom_call.1} parent=5 // pred_fallthru
        _
      %p459 = scmp.le.s32.totalorder 2, %s16
      // Predicated region
      $region45: #{tpu_custom_call.1} parent=5 // pred_check
        %p460 = pneg %p459
      $region46: #{tpu_custom_call.1} parent=5 // pred_check_branch
        %462 = sbr.rel (%p460) target = $region48
      $region47: #{tpu_custom_call.1} parent=5 // pred_region
        %s463 = ssub.s32 %s16, 2
        // Predicated region
        $region49: #{tpu_custom_call.1} parent=47 // pred_check
          %p464 = pneg %p155
        $region50: #{tpu_custom_call.1} parent=47 // pred_check_branch
          %466 = sbr.rel (%p464) target = $region52
        $region51: #{tpu_custom_call.1} parent=47 // pred_region
          %s467 = sand.u32 %s140, 1
          %s468 = scalar_lea.sflag [#allocation4], %s467
          %s469 = sand.u32 %s140, 1
          %s470 = scalar_lea.vmem [#allocation3], %s469
          %471 = dma.done %s468, 16
        $region52: #{tpu_custom_call.1} parent=47 // pred_fallthru
          _
      $region48: #{tpu_custom_call.1} parent=5 // pred_fallthru
        _
    $region6: #{tpu_custom_call.1} parent=1 // loop_footer
      %s20 = sadd.s32 1, %s16
    $region7: #{tpu_custom_call.1} parent=1 // loop_footer_branch
      %15 = sbr.rel target = $region3
    $region8: #{tpu_custom_call.1} parent=1 // loop_exit
      _
    %472 = vsyncpa [#allocation4], 1
    %s473 = scalar_lea.sflag [#allocation4], 1
    %474 = vsyncpa %s473, 1

</llo_original>
